<compile_context>
chip_gen: v6e
topology: v6e:2x2x1
jax: 0.10.0
libtpu: 0.0.40
codegen_flags: <defaults>
</compile_context>

<pallas_src>
import jax
import jax.numpy as jnp
from jax.experimental import pallas as pl
from jax.experimental.pallas import tpu as pltpu

EPS = 1e-5
H1, H2, OUT = 512, 128, 2
OUT_PAD = 128          # lane-dense output width; real outputs are columns [:2]
MAX_TILE_B = 512       # batch tile: ~1 MiB f32 activations


def _mlp_kernel(x_ref, w1_ref, b1_ref, w2_ref, b2_ref, w3_ref, b3_ref, o_ref):
    # fc1 (+ folded bn1) + relu        (dropout = identity in eval mode)
    h = jnp.dot(x_ref[...], w1_ref[...], preferred_element_type=jnp.float32)
    h = jnp.maximum(h + b1_ref[...], 0.0)
    # fc2 (+ folded bn2) + relu
    h = jnp.dot(h, w2_ref[...], preferred_element_type=jnp.float32)
    h = jnp.maximum(h + b2_ref[...], 0.0)
    # fc3 (output padded to 128 lanes -> unmasked, lane-dense stores)
    o_ref[...] = (jnp.dot(h, w3_ref[...], preferred_element_type=jnp.float32)
                  + b3_ref[...]).astype(o_ref.dtype)


def _round_up(n, m):
    return (n + m - 1) // m * m


@jax.jit
def regression_model2_forward(x, params):
    """x: (B, input_size) float32.  params: dict of weights/BN buffers."""
    B, in_dim = x.shape

    # ---- fold BatchNorm + bias into the linear weights (tiny; done per call) ----
    s1 = params["g1"] * jax.lax.rsqrt(params["v1"] + EPS)            # (1, 512)
    w1f = params["w1"] * s1
    b1f = (params["b1"] - params["m1"]) * s1 + params["be1"]
    s2 = params["g2"] * jax.lax.rsqrt(params["v2"] + EPS)            # (1, 128)
    w2f = params["w2"] * s2
    b2f = (params["b2"] - params["m2"]) * s2 + params["be2"]

    # ---- pad fc3 to a lane-dense width ----
    w3p = jnp.zeros((H2, OUT_PAD), jnp.float32).at[:, :OUT].set(params["w3"])
    b3p = jnp.zeros((1, OUT_PAD), jnp.float32).at[:, :OUT].set(params["b3"])

    # ---- batch tiling (sublane-aligned) ----
    tile_b = min(MAX_TILE_B, _round_up(B, 8))
    pb = _round_up(B, tile_b)
    xp = x if pb == B else jnp.pad(x, ((0, pb - B), (0, 0)))
    grid = (pb // tile_b,)

    flops = 2 * pb * (in_dim * H1 + H1 * H2 + H2 * OUT_PAD)
    bytes_accessed = 4 * (pb * in_dim + pb * OUT_PAD
                          + in_dim * H1 + H1 + H1 * H2 + H2 + H2 * OUT_PAD + OUT_PAD)

    out = pl.pallas_call(
        _mlp_kernel,
        out_shape=jax.ShapeDtypeStruct((pb, OUT_PAD), jnp.float32),
        grid=grid,
        in_specs=[
            pl.BlockSpec((tile_b, in_dim), lambda i: (i, 0)),   # x: streamed per tile
            pl.BlockSpec((in_dim, H1), lambda i: (0, 0)),       # weights: VMEM-resident
            pl.BlockSpec((1, H1), lambda i: (0, 0)),
            pl.BlockSpec((H1, H2), lambda i: (0, 0)),
            pl.BlockSpec((1, H2), lambda i: (0, 0)),
            pl.BlockSpec((H2, OUT_PAD), lambda i: (0, 0)),
            pl.BlockSpec((1, OUT_PAD), lambda i: (0, 0)),
        ],
        out_specs=pl.BlockSpec((tile_b, OUT_PAD), lambda i: (i, 0)),
        compiler_params=pltpu.CompilerParams(
            dimension_semantics=("parallel",)),
        cost_estimate=pl.CostEstimate(flops=flops, transcendentals=0,
                                      bytes_accessed=bytes_accessed),
    )(xp, w1f, b1f, w2f, b2f, w3p, b3p)

    return out[:B, :OUT]


def init_params(key, input_size):
    """Deterministic init mirroring RegressionModel2.__init__ (eval-mode BN stats)."""
    k1, k2, k3 = jax.random.split(key, 3)

    def xavier_normal(k, fan_in, fan_out):
        std = (2.0 / (fan_in + fan_out)) ** 0.5
        # stored as (in, out) so the kernel computes x @ W
        return std * jax.random.normal(k, (fan_in, fan_out), dtype=jnp.float32)

    return {
        "w1": xavier_normal(k1, input_size, H1),
        "b1": jnp.zeros((1, H1), jnp.float32),
        "g1": jnp.ones((1, H1), jnp.float32),    # bn1 gamma
        "be1": jnp.zeros((1, H1), jnp.float32),  # bn1 beta
        "m1": jnp.zeros((1, H1), jnp.float32),   # bn1 running_mean
        "v1": jnp.ones((1, H1), jnp.float32),    # bn1 running_var
        "w2": xavier_normal(k2, H1, H2),
        "b2": jnp.zeros((1, H2), jnp.float32),
        "g2": jnp.ones((1, H2), jnp.float32),
        "be2": jnp.zeros((1, H2), jnp.float32),
        "m2": jnp.zeros((1, H2), jnp.float32),
        "v2": jnp.ones((1, H2), jnp.float32),
        "w3": xavier_normal(k3, H2, OUT),
        "b3": jnp.zeros((1, OUT), jnp.float32),
    }


def reference_forward(x, p):
    """Plain-JAX reference (eval-mode semantics)."""
    h = x @ p["w1"] + p["b1"]
    h = (h - p["m1"]) * jax.lax.rsqrt(p["v1"] + EPS) * p["g1"] + p["be1"]
    h = jnp.maximum(h, 0.0)
    h = h @ p["w2"] + p["b2"]
    h = (h - p["m2"]) * jax.lax.rsqrt(p["v2"] + EPS) * p["g2"] + p["be2"]
    h = jnp.maximum(h, 0.0)
    return h @ p["w3"] + p["b3"]


if __name__ == "__main__":
    # TODO(synk): training-mode dropout / BN batch stats are not implemented
    # (forward here matches model.eval() semantics used by predict()).
    key = jax.random.PRNGKey(0)
    k_x, k_p = jax.random.split(key)

    batch, input_size = 8, 32
    x = jax.random.normal(k_x, (batch, input_size), dtype=jnp.float32)
    params = init_params(k_p, input_size)

    out = regression_model2_forward(x, params)
    out = jax.block_until_ready(out)

    ref = reference_forward(x, params)
    assert out.shape == (batch, OUT)
    assert jnp.allclose(out, ref, atol=1e-4, rtol=1e-4), "mismatch vs reference"

    print("KERNEL_OK")
</pallas_src>

<mosaic_0001>
module attributes {stable_mosaic.version = 11 : i64} {
  func.func @_mlp_kernel(%arg0: i32, %arg1: memref<8x32xf32, #tpu.memory_space<vmem>>, %arg2: memref<32x512xf32, #tpu.memory_space<vmem>>, %arg3: memref<1x512xf32, #tpu.memory_space<vmem>>, %arg4: memref<512x128xf32, #tpu.memory_space<vmem>>, %arg5: memref<1x128xf32, #tpu.memory_space<vmem>>, %arg6: memref<128x128xf32, #tpu.memory_space<vmem>>, %arg7: memref<1x128xf32, #tpu.memory_space<vmem>>, %arg8: memref<8x128xf32, #tpu.memory_space<vmem>>) attributes {dimension_semantics = [#tpu.dimension_semantics<parallel>], iteration_bounds = array<i64: 1>, scalar_prefetch = 0 : i64, scratch_operands = 0 : i64, tpu.core_type = #tpu.core_type<tc>, window_params = [{transform_indices = @transform_0, window_bounds = array<i64: 8, 32>}, {pipeline_mode = #tpu.pipeline_mode<synchronous>, transform_indices = @transform_1, window_bounds = array<i64: 32, 512>}, {pipeline_mode = #tpu.pipeline_mode<synchronous>, transform_indices = @transform_2, window_bounds = array<i64: 1, 512>}, {pipeline_mode = #tpu.pipeline_mode<synchronous>, transform_indices = @transform_3, window_bounds = array<i64: 512, 128>}, {pipeline_mode = #tpu.pipeline_mode<synchronous>, transform_indices = @transform_4, window_bounds = array<i64: 1, 128>}, {pipeline_mode = #tpu.pipeline_mode<synchronous>, transform_indices = @transform_5, window_bounds = array<i64: 128, 128>}, {pipeline_mode = #tpu.pipeline_mode<synchronous>, transform_indices = @transform_6, window_bounds = array<i64: 1, 128>}, {transform_indices = @transform_7, window_bounds = array<i64: 8, 128>}]} {
    %c0 = arith.constant 0 : index
    %c0_0 = arith.constant 0 : index
    %0 = vector.load %arg1[%c0, %c0_0] : memref<8x32xf32, #tpu.memory_space<vmem>>, vector<8x32xf32>
    %c0_1 = arith.constant 0 : index
    %c0_2 = arith.constant 0 : index
    %1 = vector.load %arg2[%c0_1, %c0_2] : memref<32x512xf32, #tpu.memory_space<vmem>>, vector<32x512xf32>
    %cst = arith.constant dense<0.000000e+00> : vector<8x512xf32>
    %2 = tpu.matmul %0, %1, %cst {dimension_numbers = #tpu.dot_dimension_numbers<[1], [0], [0], [1], [0, 0, 1, 1], [], []>} : vector<8x32xf32>, vector<32x512xf32>, vector<8x512xf32> -> vector<8x512xf32>
    %c0_3 = arith.constant 0 : index
    %c0_4 = arith.constant 0 : index
    %3 = vector.load %arg3[%c0_3, %c0_4] : memref<1x512xf32, #tpu.memory_space<vmem>>, vector<1x512xf32>
    %4 = vector.broadcast %3 : vector<1x512xf32> to vector<8x512xf32>
    %5 = arith.addf %2, %4 : vector<8x512xf32>
    %cst_5 = arith.constant 0.000000e+00 : f32
    %6 = vector.broadcast %cst_5 : f32 to vector<8x512xf32>
    %7 = arith.maximumf %5, %6 : vector<8x512xf32>
    %c0_6 = arith.constant 0 : index
    %c0_7 = arith.constant 0 : index
    %8 = vector.load %arg4[%c0_6, %c0_7] : memref<512x128xf32, #tpu.memory_space<vmem>>, vector<512x128xf32>
    %cst_8 = arith.constant dense<0.000000e+00> : vector<8x128xf32>
    %9 = tpu.matmul %7, %8, %cst_8 {dimension_numbers = #tpu.dot_dimension_numbers<[1], [0], [0], [1], [0, 0, 1, 1], [], []>} : vector<8x512xf32>, vector<512x128xf32>, vector<8x128xf32> -> vector<8x128xf32>
    %c0_9 = arith.constant 0 : index
    %c0_10 = arith.constant 0 : index
    %10 = vector.load %arg5[%c0_9, %c0_10] : memref<1x128xf32, #tpu.memory_space<vmem>>, vector<1x128xf32>
    %11 = vector.broadcast %10 : vector<1x128xf32> to vector<8x128xf32>
    %12 = arith.addf %9, %11 : vector<8x128xf32>
    %cst_11 = arith.constant 0.000000e+00 : f32
    %13 = vector.broadcast %cst_11 : f32 to vector<8x128xf32>
    %14 = arith.maximumf %12, %13 : vector<8x128xf32>
    %c0_12 = arith.constant 0 : index
    %c0_13 = arith.constant 0 : index
    %15 = vector.load %arg6[%c0_12, %c0_13] : memref<128x128xf32, #tpu.memory_space<vmem>>, vector<128x128xf32>
    %cst_14 = arith.constant dense<0.000000e+00> : vector<8x128xf32>
    %16 = tpu.matmul %14, %15, %cst_14 {dimension_numbers = #tpu.dot_dimension_numbers<[1], [0], [0], [1], [0, 0, 1, 1], [], []>} : vector<8x128xf32>, vector<128x128xf32>, vector<8x128xf32> -> vector<8x128xf32>
    %c0_15 = arith.constant 0 : index
    %c0_16 = arith.constant 0 : index
    %17 = vector.load %arg7[%c0_15, %c0_16] : memref<1x128xf32, #tpu.memory_space<vmem>>, vector<1x128xf32>
    %18 = vector.broadcast %17 : vector<1x128xf32> to vector<8x128xf32>
    %19 = arith.addf %16, %18 : vector<8x128xf32>
    %c0_17 = arith.constant 0 : index
    %c0_18 = arith.constant 0 : index
    %20 = vector.load %arg8[%c0_17, %c0_18] : memref<8x128xf32, #tpu.memory_space<vmem>>, vector<8x128xf32>
    tpu.vector_store %arg8[%c0_17, %c0_18], %19 {strides = array<i32>} : memref<8x128xf32, #tpu.memory_space<vmem>>, vector<8x128xf32>,
    return
  }
  func.func @transform_0(%arg0: i32) -> (i32, i32) {
    %c0_i32 = arith.constant 0 : i32
    %c0_i32_0 = arith.constant 0 : i32
    return %arg0, %c0_i32 : i32, i32
  }
  func.func @transform_1(%arg0: i32) -> (i32, i32) {
    %c0_i32 = arith.constant 0 : i32
    %c0_i32_0 = arith.constant 0 : i32
    %c0_i32_1 = arith.constant 0 : i32
    return %c0_i32, %c0_i32_0 : i32, i32
  }
  func.func @transform_2(%arg0: i32) -> (i32, i32) {
    %c0_i32 = arith.constant 0 : i32
    %c0_i32_0 = arith.constant 0 : i32
    %c0_i32_1 = arith.constant 0 : i32
    return %c0_i32, %c0_i32_0 : i32, i32
  }
  func.func @transform_3(%arg0: i32) -> (i32, i32) {
    %c0_i32 = arith.constant 0 : i32
    %c0_i32_0 = arith.constant 0 : i32
    %c0_i32_1 = arith.constant 0 : i32
    return %c0_i32, %c0_i32_0 : i32, i32
  }
  func.func @transform_4(%arg0: i32) -> (i32, i32) {
    %c0_i32 = arith.constant 0 : i32
    %c0_i32_0 = arith.constant 0 : i32
    %c0_i32_1 = arith.constant 0 : i32
    return %c0_i32, %c0_i32_0 : i32, i32
  }
  func.func @transform_5(%arg0: i32) -> (i32, i32) {
    %c0_i32 = arith.constant 0 : i32
    %c0_i32_0 = arith.constant 0 : i32
    %c0_i32_1 = arith.constant 0 : i32
    return %c0_i32, %c0_i32_0 : i32, i32
  }
  func.func @transform_6(%arg0: i32) -> (i32, i32) {
    %c0_i32 = arith.constant 0 : i32
    %c0_i32_0 = arith.constant 0 : i32
    %c0_i32_1 = arith.constant 0 : i32
    return %c0_i32, %c0_i32_0 : i32, i32
  }
  func.func @transform_7(%arg0: i32) -> (i32, i32) {
    %c0_i32 = arith.constant 0 : i32
    %c0_i32_0 = arith.constant 0 : i32
    return %arg0, %c0_i32 : i32, i32
  }
}

</mosaic_0001>

<llo_original>
// kernel: regression_model2_forward.1
$region0: #{regression_model2_forward.1}
  #allocation0 [shape = 'u32[]', space=smem, size = 0x4, offset = 0x4, fixed_abs, tag = 'smem constant byte address 0x4 - core index']
  #allocation1 [shape = 'u32[144,128]{1,0:T(1,128)}', space=vmem, size = 0x12000, scoped, tag = 'internal scratch']
  %s0 = inlined_call_operand.vmem [shape: f32[8,32], index: 0, kind: input, shape index: {}]
  %s1 = inlined_call_operand.vmem [shape: f32[32,512], index: 1, kind: input, shape index: {}]
  %s2 = inlined_call_operand.vmem [shape: f32[1,512], index: 2, kind: input, shape index: {}]
  %s3 = inlined_call_operand.vmem [shape: f32[512,128], index: 3, kind: input, shape index: {}]
  %s4 = inlined_call_operand.vmem [shape: f32[1,128], index: 4, kind: input, shape index: {}]
  %s5 = inlined_call_operand.vmem [shape: f32[128,128], index: 5, kind: input, shape index: {}]
  %s6 = inlined_call_operand.vmem [shape: f32[1,128], index: 6, kind: input, shape index: {}]
  %s7 = inlined_call_operand.vmem [shape: f32[8,128], index: 7, kind: output, shape index: {}]
  %s8 = sld [smem:[#allocation0]]
  $region38: #{regression_model2_forward.1} parent=0
    _
  %s10 = ssub.s32 1, %s8
  %s11 = scalar_select 0, %s10, %s8
  // Predicated region
  $region2: #{regression_model2_forward.1} parent=0 // pred_check
    _
  $region3: #{regression_model2_forward.1} parent=0 // pred_check_branch
    %13 = sbr.rel (0) target = $region5
  $region4: #{regression_model2_forward.1} parent=0 // pred_region
    _
  $region5: #{regression_model2_forward.1} parent=0 // pred_fallthru
    _
  // Predicated region
  $region6: #{regression_model2_forward.1} parent=0 // pred_check
    _
  $region7: #{regression_model2_forward.1} parent=0 // pred_check_branch
    %15 = sbr.rel (0) target = $region9
  $region8: #{regression_model2_forward.1} parent=0 // pred_region
    _
  $region9: #{regression_model2_forward.1} parent=0 // pred_fallthru
    _
  // Predicated region
  $region10: #{regression_model2_forward.1} parent=0 // pred_check
    _
  $region11: #{regression_model2_forward.1} parent=0 // pred_check_branch
    %17 = sbr.rel (0) target = $region13
  $region12: #{regression_model2_forward.1} parent=0 // pred_region
    _
  $region13: #{regression_model2_forward.1} parent=0 // pred_fallthru
    _
  // Predicated region
  $region14: #{regression_model2_forward.1} parent=0 // pred_check
    _
  $region15: #{regression_model2_forward.1} parent=0 // pred_check_branch
    %19 = sbr.rel (0) target = $region17
  $region16: #{regression_model2_forward.1} parent=0 // pred_region
    _
  $region17: #{regression_model2_forward.1} parent=0 // pred_fallthru
    _
  // Predicated region
  $region18: #{regression_model2_forward.1} parent=0 // pred_check
    _
  $region19: #{regression_model2_forward.1} parent=0 // pred_check_branch
    %21 = sbr.rel (0) target = $region21
  $region20: #{regression_model2_forward.1} parent=0 // pred_region
    _
  $region21: #{regression_model2_forward.1} parent=0 // pred_fallthru
    _
  // Predicated region
  $region22: #{regression_model2_forward.1} parent=0 // pred_check
    _
  $region23: #{regression_model2_forward.1} parent=0 // pred_check_branch
    %23 = sbr.rel (0) target = $region25
  $region24: #{regression_model2_forward.1} parent=0 // pred_region
    _
  $region25: #{regression_model2_forward.1} parent=0 // pred_fallthru
    _
  // Predicated region
  $region26: #{regression_model2_forward.1} parent=0 // pred_check
    _
  $region27: #{regression_model2_forward.1} parent=0 // pred_check_branch
    %25 = sbr.rel (0) target = $region29
  $region28: #{regression_model2_forward.1} parent=0 // pred_region
    _
  $region29: #{regression_model2_forward.1} parent=0 // pred_fallthru
    _
  %v26 = vld [vmem:[%s0] sm:$0xff]
  %v27 = vld [vmem:[%s1] sm:$0xff]
  %v28 = vld [vmem:[%s1 + $0x8] sm:$0xff]
  %v29 = vld [vmem:[%s1 + $0x10] sm:$0xff]
  %v30 = vld [vmem:[%s1 + $0x18] sm:$0xff]
  %v31 = vld [vmem:[%s1 + $0x20] sm:$0xff]
  %v32 = vld [vmem:[%s1 + $0x28] sm:$0xff]
  %v33 = vld [vmem:[%s1 + $0x30] sm:$0xff]
  %v34 = vld [vmem:[%s1 + $0x38] sm:$0xff]
  %v35 = vld [vmem:[%s1 + $0x40] sm:$0xff]
  %v36 = vld [vmem:[%s1 + $0x48] sm:$0xff]
  %v37 = vld [vmem:[%s1 + $0x50] sm:$0xff]
  %v38 = vld [vmem:[%s1 + $0x58] sm:$0xff]
  %v39 = vld [vmem:[%s1 + $0x60] sm:$0xff]
  %v40 = vld [vmem:[%s1 + $0x68] sm:$0xff]
  %v41 = vld [vmem:[%s1 + $0x70] sm:$0xff]
  %v42 = vld [vmem:[%s1 + $0x78] sm:$0xff]
  %v43 = vld [vmem:[%s2] sm:$0xf]
  %v45 = vlaneseq
  %v46 = vshrl.u32 %v45, 7
  %v47 = vsub.s32 0, %v46
  %v48 = vrot.slane %v43, %v47
  %v49 = vlaneseq
  %v50 = vshrl.u32 %v49, 7
  %v51 = vsub.s32 1, %v50
  %v52 = vrot.slane %v43, %v51
  %v53 = vlaneseq
  %v54 = vshrl.u32 %v53, 7
  %v55 = vsub.s32 2, %v54
  %v56 = vrot.slane %v43, %v55
  %v57 = vlaneseq
  %v58 = vshrl.u32 %v57, 7
  %v59 = vsub.s32 3, %v58
  %v60 = vrot.slane %v43, %v59
  %vm65 = vcmask 261120
  %v67 = vsel %vm65, %v26, 0
  %69 = vmatprep.subr.mxu0 0.0
  %70 = vmatpush1.msra.mxu0 0.0
  %71 = vmatprep.subr.mxu0 0.0
  %72 = vmatpush1.msra.mxu0 0.0
  %73 = vmatprep.subr.mxu0 0.0
  %74 = vmatpush1.msra.mxu0 0.0
  %75 = vmatprep.subr.mxu0 0.0
  %76 = vmatpush1.msra.mxu0 0.0
  %77 = vmatprep.subr.mxu0 0.0
  %78 = vmatpush1.msra.mxu0 0.0
  %79 = vmatprep.subr.mxu0 0.0
  %80 = vmatpush1.msra.mxu0 0.0
  %81 = vmatprep.subr.mxu0 0.0
  %82 = vmatpush1.msra.mxu0 0.0
  %83 = vmatprep.subr.mxu0 0.0
  %84 = vmatpush1.msra.mxu0 0.0
  %85 = vmatprep.subr.mxu0 0.0
  %86 = vmatpush1.msra.mxu0 0.0
  %87 = vmatprep.subr.mxu0 0.0
  %88 = vmatpush1.msra.mxu0 0.0
  %89 = vmatprep.subr.mxu0 0.0
  %90 = vmatpush1.msra.mxu0 0.0
  %91 = vmatprep.subr.mxu0 0.0
  %92 = vmatpush1.msra.mxu0 0.0
  %93 = vmatprep.subr.mxu0 %v40
  %94 = vmatpush1.msra.mxu0 %v39
  %95 = vmatprep.subr.mxu0 %v36
  %96 = vmatpush1.msra.mxu0 %v35
  %97 = vmatprep.subr.mxu0 %v32
  %98 = vmatpush1.msra.mxu0 %v31
  %99 = vmatprep.subr.mxu0 %v28
  %100 = vmatpush1.msra.mxu0 %v27
  %101 = vmatprep.subr.mxu0 0.0
  %102 = vmatpush2.msra.mxu0 0.0
  %103 = vmatprep.subr.mxu0 0.0
  %104 = vmatpush2.msra.mxu0 0.0
  %105 = vmatprep.subr.mxu0 0.0
  %106 = vmatpush2.msra.mxu0 0.0
  %107 = vmatprep.subr.mxu0 0.0
  %108 = vmatpush2.msra.mxu0 0.0
  %109 = vmatprep.subr.mxu0 0.0
  %110 = vmatpush2.msra.mxu0 0.0
  %111 = vmatprep.subr.mxu0 0.0
  %112 = vmatpush2.msra.mxu0 0.0
  %113 = vmatprep.subr.mxu0 0.0
  %114 = vmatpush2.msra.mxu0 0.0
  %115 = vmatprep.subr.mxu0 0.0
  %116 = vmatpush2.msra.mxu0 0.0
  %117 = vmatprep.subr.mxu0 0.0
  %118 = vmatpush2.msra.mxu0 0.0
  %119 = vmatprep.subr.mxu0 0.0
  %120 = vmatpush2.msra.mxu0 0.0
  %121 = vmatprep.subr.mxu0 0.0
  %122 = vmatpush2.msra.mxu0 0.0
  %123 = vmatprep.subr.mxu0 0.0
  %124 = vmatpush2.msra.mxu0 0.0
  %125 = vmatprep.subr.mxu0 0.0
  %126 = vmatpush2.msra.mxu0 0.0
  %127 = vmatprep.subr.mxu0 0.0
  %128 = vmatpush2.msra.mxu0 0.0
  %129 = vmatprep.subr.mxu0 0.0
  %130 = vmatpush2.msra.mxu0 0.0
  %131 = vmatprep.subr.mxu0 0.0
  %132 = vmatpush2.msra.mxu0 0.0
  %133 = vmatprep.mubr.f32.mxu0 0.0
  %134 = vmatmul.mubr.f32.gmra.mxu0 %v67
  %v135 = vpop.f32.mrf.mxu0
  %v136 = vadd.f32 %v48, %v135
  %v137 = vpop.f32.mrf.mxu0
  %v138 = vadd.f32 %v52, %v137
  %139 = vdwg.mxu0
  %140 = vmatprep.subr.mxu0 0.0
  %141 = vmatpush1.msra.mxu0 0.0
  %142 = vmatprep.subr.mxu0 0.0
  %143 = vmatpush1.msra.mxu0 0.0
  %144 = vmatprep.subr.mxu0 0.0
  %145 = vmatpush1.msra.mxu0 0.0
  %146 = vmatprep.subr.mxu0 0.0
  %147 = vmatpush1.msra.mxu0 0.0
  %148 = vmatprep.subr.mxu0 0.0
  %149 = vmatpush1.msra.mxu0 0.0
  %150 = vmatprep.subr.mxu0 0.0
  %151 = vmatpush1.msra.mxu0 0.0
  %152 = vmatprep.subr.mxu0 0.0
  %153 = vmatpush1.msra.mxu0 0.0
  %154 = vmatprep.subr.mxu0 0.0
  %155 = vmatpush1.msra.mxu0 0.0
  %156 = vmatprep.subr.mxu0 0.0
  %157 = vmatpush1.msra.mxu0 0.0
  %158 = vmatprep.subr.mxu0 0.0
  %159 = vmatpush1.msra.mxu0 0.0
  %160 = vmatprep.subr.mxu0 0.0
  %161 = vmatpush1.msra.mxu0 0.0
  %162 = vmatprep.subr.mxu0 0.0
  %163 = vmatpush1.msra.mxu0 0.0
  %164 = vmatprep.subr.mxu0 %v42
  %165 = vmatpush1.msra.mxu0 %v41
  %166 = vmatprep.subr.mxu0 %v38
  %167 = vmatpush1.msra.mxu0 %v37
  %168 = vmatprep.subr.mxu0 %v34
  %169 = vmatpush1.msra.mxu0 %v33
  %170 = vmatprep.subr.mxu0 %v30
  %171 = vmatpush1.msra.mxu0 %v29
  %172 = vmatprep.subr.mxu0 0.0
  %173 = vmatpush2.msra.mxu0 0.0
  %174 = vmatprep.subr.mxu0 0.0
  %175 = vmatpush2.msra.mxu0 0.0
  %176 = vmatprep.subr.mxu0 0.0
  %177 = vmatpush2.msra.mxu0 0.0
  %178 = vmatprep.subr.mxu0 0.0
  %179 = vmatpush2.msra.mxu0 0.0
  %180 = vmatprep.subr.mxu0 0.0
  %181 = vmatpush2.msra.mxu0 0.0
  %182 = vmatprep.subr.mxu0 0.0
  %183 = vmatpush2.msra.mxu0 0.0
  %184 = vmatprep.subr.mxu0 0.0
  %185 = vmatpush2.msra.mxu0 0.0
  %186 = vmatprep.subr.mxu0 0.0
  %187 = vmatpush2.msra.mxu0 0.0
  %188 = vmatprep.subr.mxu0 0.0
  %189 = vmatpush2.msra.mxu0 0.0
  %190 = vmatprep.subr.mxu0 0.0
  %191 = vmatpush2.msra.mxu0 0.0
  %192 = vmatprep.subr.mxu0 0.0
  %193 = vmatpush2.msra.mxu0 0.0
  %194 = vmatprep.subr.mxu0 0.0
  %195 = vmatpush2.msra.mxu0 0.0
  %196 = vmatprep.subr.mxu0 0.0
  %197 = vmatpush2.msra.mxu0 0.0
  %198 = vmatprep.subr.mxu0 0.0
  %199 = vmatpush2.msra.mxu0 0.0
  %200 = vmatprep.subr.mxu0 0.0
  %201 = vmatpush2.msra.mxu0 0.0
  %202 = vmatprep.subr.mxu0 0.0
  %203 = vmatpush2.msra.mxu0 0.0
  %204 = vmatprep.mubr.f32.mxu0 0.0
  %205 = vmatmul.mubr.f32.gmra.mxu0 %v67
  %v206 = vpop.f32.mrf.mxu0
  %v207 = vadd.f32 %v56, %v206
  %v208 = vpop.f32.mrf.mxu0
  %v209 = vadd.f32 %v60, %v208
  %210 = vdwg.mxu0
  %v211 = vmax.f32 %v136, 0.0
  %v212 = vmax.f32 %v138, 0.0
  %v213 = vmax.f32 %v207, 0.0
  %v214 = vmax.f32 %v209, 0.0
  %v215 = vld [vmem:[%s3] sm:$0xff]
  %v216 = vld [vmem:[%s3 + $0x8] sm:$0xff]
  %v217 = vld [vmem:[%s3 + $0x10] sm:$0xff]
  %v218 = vld [vmem:[%s3 + $0x18] sm:$0xff]
  %v219 = vld [vmem:[%s3 + $0x20] sm:$0xff]
  %v220 = vld [vmem:[%s3 + $0x28] sm:$0xff]
  %v221 = vld [vmem:[%s3 + $0x30] sm:$0xff]
  %v222 = vld [vmem:[%s3 + $0x38] sm:$0xff]
  %v223 = vld [vmem:[%s3 + $0x40] sm:$0xff]
  %v224 = vld [vmem:[%s3 + $0x48] sm:$0xff]
  %v225 = vld [vmem:[%s3 + $0x50] sm:$0xff]
  %v226 = vld [vmem:[%s3 + $0x58] sm:$0xff]
  %v227 = vld [vmem:[%s3 + $0x60] sm:$0xff]
  %v228 = vld [vmem:[%s3 + $0x68] sm:$0xff]
  %v229 = vld [vmem:[%s3 + $0x70] sm:$0xff]
  %v230 = vld [vmem:[%s3 + $0x78] sm:$0xff]
  %v231 = vld [vmem:[%s3 + $0x80] sm:$0xff]
  %v232 = vld [vmem:[%s3 + $0x88] sm:$0xff]
  %v233 = vld [vmem:[%s3 + $0x90] sm:$0xff]
  %v234 = vld [vmem:[%s3 + $0x98] sm:$0xff]
  %v235 = vld [vmem:[%s3 + $0xa0] sm:$0xff]
  %v236 = vld [vmem:[%s3 + $0xa8] sm:$0xff]
  %v237 = vld [vmem:[%s3 + $0xb0] sm:$0xff]
  %v238 = vld [vmem:[%s3 + $0xb8] sm:$0xff]
  %v239 = vld [vmem:[%s3 + $0xc0] sm:$0xff]
  %v240 = vld [vmem:[%s3 + $0xc8] sm:$0xff]
  %v241 = vld [vmem:[%s3 + $0xd0] sm:$0xff]
  %v242 = vld [vmem:[%s3 + $0xd8] sm:$0xff]
  %v243 = vld [vmem:[%s3 + $0xe0] sm:$0xff]
  %v244 = vld [vmem:[%s3 + $0xe8] sm:$0xff]
  %v245 = vld [vmem:[%s3 + $0xf0] sm:$0xff]
  %v246 = vld [vmem:[%s3 + $0xf8] sm:$0xff]
  %v247 = vld [vmem:[%s3 + $0x100] sm:$0xff]
  %v248 = vld [vmem:[%s3 + $0x108] sm:$0xff]
  %v249 = vld [vmem:[%s3 + $0x110] sm:$0xff]
  %v250 = vld [vmem:[%s3 + $0x118] sm:$0xff]
  %v251 = vld [vmem:[%s3 + $0x120] sm:$0xff]
  %v252 = vld [vmem:[%s3 + $0x128] sm:$0xff]
  %v253 = vld [vmem:[%s3 + $0x130] sm:$0xff]
  %v254 = vld [vmem:[%s3 + $0x138] sm:$0xff]
  %v255 = vld [vmem:[%s3 + $0x140] sm:$0xff]
  %v256 = vld [vmem:[%s3 + $0x148] sm:$0xff]
  %v257 = vld [vmem:[%s3 + $0x150] sm:$0xff]
  %v258 = vld [vmem:[%s3 + $0x158] sm:$0xff]
  %v259 = vld [vmem:[%s3 + $0x160] sm:$0xff]
  %v260 = vld [vmem:[%s3 + $0x168] sm:$0xff]
  %v261 = vld [vmem:[%s3 + $0x170] sm:$0xff]
  %v262 = vld [vmem:[%s3 + $0x178] sm:$0xff]
  %v263 = vld [vmem:[%s3 + $0x180] sm:$0xff]
  %v264 = vld [vmem:[%s3 + $0x188] sm:$0xff]
  %v265 = vld [vmem:[%s3 + $0x190] sm:$0xff]
  %v266 = vld [vmem:[%s3 + $0x198] sm:$0xff]
  %v267 = vld [vmem:[%s3 + $0x1a0] sm:$0xff]
  %v268 = vld [vmem:[%s3 + $0x1a8] sm:$0xff]
  %v269 = vld [vmem:[%s3 + $0x1b0] sm:$0xff]
  %v270 = vld [vmem:[%s3 + $0x1b8] sm:$0xff]
  %v271 = vld [vmem:[%s3 + $0x1c0] sm:$0xff]
  %v272 = vld [vmem:[%s3 + $0x1c8] sm:$0xff]
  %v273 = vld [vmem:[%s3 + $0x1d0] sm:$0xff]
  %v274 = vld [vmem:[%s3 + $0x1d8] sm:$0xff]
  %v275 = vld [vmem:[%s3 + $0x1e0] sm:$0xff]
  %v276 = vld [vmem:[%s3 + $0x1e8] sm:$0xff]
  %v277 = vld [vmem:[%s3 + $0x1f0] sm:$0xff]
  %v278 = vld [vmem:[%s3 + $0x1f8] sm:$0xff]
  %v279 = vld [vmem:[%s4] sm:$0x1]
  %v281 = vlaneseq
  %v282 = vshrl.u32 %v281, 7
  %v283 = vsub.s32 0, %v282
  %v284 = vrot.slane %v279, %v283
  %286 = vmatprep.subr.mxu0 0.0
  %287 = vmatpush1.msra.mxu0 %v230
  %288 = vmatprep.subr.mxu0 0.0
  %289 = vmatpush1.msra.mxu0 %v229
  %290 = vmatprep.subr.mxu0 0.0
  %291 = vmatpush1.msra.mxu0 %v228
  %292 = vmatprep.subr.mxu0 0.0
  %293 = vmatpush1.msra.mxu0 %v227
  %294 = vmatprep.subr.mxu0 0.0
  %295 = vmatpush1.msra.mxu0 %v226
  %296 = vmatprep.subr.mxu0 0.0
  %297 = vmatpush1.msra.mxu0 %v225
  %298 = vmatprep.subr.mxu0 0.0
  %299 = vmatpush1.msra.mxu0 %v224
  %300 = vmatprep.subr.mxu0 0.0
  %301 = vmatpush1.msra.mxu0 %v223
  %302 = vmatprep.subr.mxu0 0.0
  %303 = vmatpush1.msra.mxu0 %v222
  %304 = vmatprep.subr.mxu0 0.0
  %305 = vmatpush1.msra.mxu0 %v221
  %306 = vmatprep.subr.mxu0 0.0
  %307 = vmatpush1.msra.mxu0 %v220
  %308 = vmatprep.subr.mxu0 0.0
  %309 = vmatpush1.msra.mxu0 %v219
  %310 = vmatprep.subr.mxu0 0.0
  %311 = vmatpush1.msra.mxu0 %v218
  %312 = vmatprep.subr.mxu0 0.0
  %313 = vmatpush1.msra.mxu0 %v217
  %314 = vmatprep.subr.mxu0 0.0
  %315 = vmatpush1.msra.mxu0 %v216
  %316 = vmatprep.subr.mxu0 0.0
  %317 = vmatpush1.msra.mxu0 %v215
  %318 = vmatprep.subr.mxu0 0.0
  %319 = vmatpush2.msra.mxu0 %v246
  %320 = vmatprep.subr.mxu0 0.0
  %321 = vmatpush2.msra.mxu0 %v245
  %322 = vmatprep.subr.mxu0 0.0
  %323 = vmatpush2.msra.mxu0 %v244
  %324 = vmatprep.subr.mxu0 0.0
  %325 = vmatpush2.msra.mxu0 %v243
  %326 = vmatprep.subr.mxu0 0.0
  %327 = vmatpush2.msra.mxu0 %v242
  %328 = vmatprep.subr.mxu0 0.0
  %329 = vmatpush2.msra.mxu0 %v241
  %330 = vmatprep.subr.mxu0 0.0
  %331 = vmatpush2.msra.mxu0 %v240
  %332 = vmatprep.subr.mxu0 0.0
  %333 = vmatpush2.msra.mxu0 %v239
  %334 = vmatprep.subr.mxu0 0.0
  %335 = vmatpush2.msra.mxu0 %v238
  %336 = vmatprep.subr.mxu0 0.0
  %337 = vmatpush2.msra.mxu0 %v237
  %338 = vmatprep.subr.mxu0 0.0
  %339 = vmatpush2.msra.mxu0 %v236
  %340 = vmatprep.subr.mxu0 0.0
  %341 = vmatpush2.msra.mxu0 %v235
  %342 = vmatprep.subr.mxu0 0.0
  %343 = vmatpush2.msra.mxu0 %v234
  %344 = vmatprep.subr.mxu0 0.0
  %345 = vmatpush2.msra.mxu0 %v233
  %346 = vmatprep.subr.mxu0 0.0
  %347 = vmatpush2.msra.mxu0 %v232
  %348 = vmatprep.subr.mxu0 0.0
  %349 = vmatpush2.msra.mxu0 %v231
  %350 = vmatprep.mubr.f32.mxu0 %v212
  %351 = vmatmul.mubr.f32.gmra.mxu0 %v211
  %v352 = vpop.f32.mrf.mxu0
  %v353 = vadd.f32 %v284, %v352
  %v354 = vpop.f32.mrf.mxu0
  %355 = vdwg.mxu0
  %356 = vmatprep.subr.mxu0 0.0
  %357 = vmatpush1.msra.mxu0 %v262
  %358 = vmatprep.subr.mxu0 0.0
  %359 = vmatpush1.msra.mxu0 %v261
  %360 = vmatprep.subr.mxu0 0.0
  %361 = vmatpush1.msra.mxu0 %v260
  %362 = vmatprep.subr.mxu0 0.0
  %363 = vmatpush1.msra.mxu0 %v259
  %364 = vmatprep.subr.mxu0 0.0
  %365 = vmatpush1.msra.mxu0 %v258
  %366 = vmatprep.subr.mxu0 0.0
  %367 = vmatpush1.msra.mxu0 %v257
  %368 = vmatprep.subr.mxu0 0.0
  %369 = vmatpush1.msra.mxu0 %v256
  %370 = vmatprep.subr.mxu0 0.0
  %371 = vmatpush1.msra.mxu0 %v255
  %372 = vmatprep.subr.mxu0 0.0
  %373 = vmatpush1.msra.mxu0 %v254
  %374 = vmatprep.subr.mxu0 0.0
  %375 = vmatpush1.msra.mxu0 %v253
  %376 = vmatprep.subr.mxu0 0.0
  %377 = vmatpush1.msra.mxu0 %v252
  %378 = vmatprep.subr.mxu0 0.0
  %379 = vmatpush1.msra.mxu0 %v251
  %380 = vmatprep.subr.mxu0 0.0
  %381 = vmatpush1.msra.mxu0 %v250
  %382 = vmatprep.subr.mxu0 0.0
  %383 = vmatpush1.msra.mxu0 %v249
  %384 = vmatprep.subr.mxu0 0.0
  %385 = vmatpush1.msra.mxu0 %v248
  %386 = vmatprep.subr.mxu0 0.0
  %387 = vmatpush1.msra.mxu0 %v247
  %388 = vmatprep.subr.mxu0 0.0
  %389 = vmatpush2.msra.mxu0 %v278
  %390 = vmatprep.subr.mxu0 0.0
  %391 = vmatpush2.msra.mxu0 %v277
  %392 = vmatprep.subr.mxu0 0.0
  %393 = vmatpush2.msra.mxu0 %v276
  %394 = vmatprep.subr.mxu0 0.0
  %395 = vmatpush2.msra.mxu0 %v275
  %396 = vmatprep.subr.mxu0 0.0
  %397 = vmatpush2.msra.mxu0 %v274
  %398 = vmatprep.subr.mxu0 0.0
  %399 = vmatpush2.msra.mxu0 %v273
  %400 = vmatprep.subr.mxu0 0.0
  %401 = vmatpush2.msra.mxu0 %v272
  %402 = vmatprep.subr.mxu0 0.0
  %403 = vmatpush2.msra.mxu0 %v271
  %404 = vmatprep.subr.mxu0 0.0
  %405 = vmatpush2.msra.mxu0 %v270
  %406 = vmatprep.subr.mxu0 0.0
  %407 = vmatpush2.msra.mxu0 %v269
  %408 = vmatprep.subr.mxu0 0.0
  %409 = vmatpush2.msra.mxu0 %v268
  %410 = vmatprep.subr.mxu0 0.0
  %411 = vmatpush2.msra.mxu0 %v267
  %412 = vmatprep.subr.mxu0 0.0
  %413 = vmatpush2.msra.mxu0 %v266
  %414 = vmatprep.subr.mxu0 0.0
  %415 = vmatpush2.msra.mxu0 %v265
  %416 = vmatprep.subr.mxu0 0.0
  %417 = vmatpush2.msra.mxu0 %v264
  %418 = vmatprep.subr.mxu0 0.0
  %419 = vmatpush2.msra.mxu0 %v263
  %420 = vmatprep.mubr.f32.mxu0 %v214
  %421 = vmatmul.mubr.f32.gmra.mxu0 %v213
  %v422 = vpop.f32.mrf.mxu0
  %v423 = vadd.f32 %v353, %v422
  %v424 = vpop.f32.mrf.mxu0
  %425 = vdwg.mxu0
  %v426 = vmax.f32 %v423, 0.0
  %v427 = vld [vmem:[%s5] sm:$0xff]
  %v428 = vld [vmem:[%s5 + $0x8] sm:$0xff]
  %v429 = vld [vmem:[%s5 + $0x10] sm:$0xff]
  %v430 = vld [vmem:[%s5 + $0x18] sm:$0xff]
  %v431 = vld [vmem:[%s5 + $0x20] sm:$0xff]
  %v432 = vld [vmem:[%s5 + $0x28] sm:$0xff]
  %v433 = vld [vmem:[%s5 + $0x30] sm:$0xff]
  %v434 = vld [vmem:[%s5 + $0x38] sm:$0xff]
  %v435 = vld [vmem:[%s5 + $0x40] sm:$0xff]
  %v436 = vld [vmem:[%s5 + $0x48] sm:$0xff]
  %v437 = vld [vmem:[%s5 + $0x50] sm:$0xff]
  %v438 = vld [vmem:[%s5 + $0x58] sm:$0xff]
  %v439 = vld [vmem:[%s5 + $0x60] sm:$0xff]
  %v440 = vld [vmem:[%s5 + $0x68] sm:$0xff]
  %v441 = vld [vmem:[%s5 + $0x70] sm:$0xff]
  %v442 = vld [vmem:[%s5 + $0x78] sm:$0xff]
  %v443 = vld [vmem:[%s6] sm:$0x1]
  %v445 = vlaneseq
  %v446 = vshrl.u32 %v445, 7
  %v447 = vsub.s32 0, %v446
  %v448 = vrot.slane %v443, %v447
  %450 = vmatprep.subr.mxu0 0.0
  %451 = vmatpush1.msra.mxu0 %v442
  %452 = vmatprep.subr.mxu0 0.0
  %453 = vmatpush1.msra.mxu0 %v441
  %454 = vmatprep.subr.mxu0 0.0
  %455 = vmatpush1.msra.mxu0 %v440
  %456 = vmatprep.subr.mxu0 0.0
  %457 = vmatpush1.msra.mxu0 %v439
  %458 = vmatprep.subr.mxu0 0.0
  %459 = vmatpush1.msra.mxu0 %v438
  %460 = vmatprep.subr.mxu0 0.0
  %461 = vmatpush1.msra.mxu0 %v437
  %462 = vmatprep.subr.mxu0 0.0
  %463 = vmatpush1.msra.mxu0 %v436
  %464 = vmatprep.subr.mxu0 0.0
  %465 = vmatpush1.msra.mxu0 %v435
  %466 = vmatprep.subr.mxu0 0.0
  %467 = vmatpush1.msra.mxu0 %v434
  %468 = vmatprep.subr.mxu0 0.0
  %469 = vmatpush1.msra.mxu0 %v433
  %470 = vmatprep.subr.mxu0 0.0
  %471 = vmatpush1.msra.mxu0 %v432
  %472 = vmatprep.subr.mxu0 0.0
  %473 = vmatpush1.msra.mxu0 %v431
  %474 = vmatprep.subr.mxu0 0.0
  %475 = vmatpush1.msra.mxu0 %v430
  %476 = vmatprep.subr.mxu0 0.0
  %477 = vmatpush1.msra.mxu0 %v429
  %478 = vmatprep.subr.mxu0 0.0
  %479 = vmatpush1.msra.mxu0 %v428
  %480 = vmatprep.subr.mxu0 0.0
  %481 = vmatpush1.msra.mxu0 %v427
  %482 = vmatprep.subr.mxu0 0.0
  %483 = vmatpush2.msra.mxu0 0.0
  %484 = vmatprep.subr.mxu0 0.0
  %485 = vmatpush2.msra.mxu0 0.0
  %486 = vmatprep.subr.mxu0 0.0
  %487 = vmatpush2.msra.mxu0 0.0
  %488 = vmatprep.subr.mxu0 0.0
  %489 = vmatpush2.msra.mxu0 0.0
  %490 = vmatprep.subr.mxu0 0.0
  %491 = vmatpush2.msra.mxu0 0.0
  %492 = vmatprep.subr.mxu0 0.0
  %493 = vmatpush2.msra.mxu0 0.0
  %494 = vmatprep.subr.mxu0 0.0
  %495 = vmatpush2.msra.mxu0 0.0
  %496 = vmatprep.subr.mxu0 0.0
  %497 = vmatpush2.msra.mxu0 0.0
  %498 = vmatprep.subr.mxu0 0.0
  %499 = vmatpush2.msra.mxu0 0.0
  %500 = vmatprep.subr.mxu0 0.0
  %501 = vmatpush2.msra.mxu0 0.0
  %502 = vmatprep.subr.mxu0 0.0
  %503 = vmatpush2.msra.mxu0 0.0
  %504 = vmatprep.subr.mxu0 0.0
  %505 = vmatpush2.msra.mxu0 0.0
  %506 = vmatprep.subr.mxu0 0.0
  %507 = vmatpush2.msra.mxu0 0.0
  %508 = vmatprep.subr.mxu0 0.0
  %509 = vmatpush2.msra.mxu0 0.0
  %510 = vmatprep.subr.mxu0 0.0
  %511 = vmatpush2.msra.mxu0 0.0
  %512 = vmatprep.subr.mxu0 0.0
  %513 = vmatpush2.msra.mxu0 0.0
  %514 = vmatprep.mubr.f32.mxu0 0.0
  %515 = vmatmul.mubr.f32.gmra.mxu0 %v426
  %v516 = vpop.f32.mrf.mxu0
  %v517 = vadd.f32 %v448, %v516
  %v518 = vpop.f32.mrf.mxu0
  %519 = vdwg.mxu0
  %520 = vst [vmem:[%s7] sm:$0xff] %v517
  // Predicated region
  $region30: #{regression_model2_forward.1} parent=0 // pred_check
    _
  $region31: #{regression_model2_forward.1} parent=0 // pred_check_branch
    %522 = sbr.rel (0) target = $region33
  $region32: #{regression_model2_forward.1} parent=0 // pred_region
    _
  $region33: #{regression_model2_forward.1} parent=0 // pred_fallthru
    _
  // Predicated region
  $region34: #{regression_model2_forward.1} parent=0 // pred_check
    _
  $region35: #{regression_model2_forward.1} parent=0 // pred_check_branch
    %524 = sbr.rel (0) target = $region37
  $region36: #{regression_model2_forward.1} parent=0 // pred_region
    _
  $region37: #{regression_model2_forward.1} parent=0 // pred_fallthru
    _

</llo_original>
